<compile_context>
chip_gen: v5e
topology: v5e:2x2
jax: 0.10.0
libtpu: 0.0.40
codegen_flags: <defaults>
</compile_context>

<pallas_src>
import functools

import jax
import jax.numpy as jnp
from jax import lax
from jax.experimental import pallas as pl
from jax.experimental.pallas import tpu as pltpu


# --------------------------------------------------------------------------
# Small helpers
# --------------------------------------------------------------------------
def _prod(xs):
    out = 1
    for v in xs:
        out *= int(v)
    return out


def _cdiv(a, b):
    return -(-int(a) // int(b))


def _round_up(v, m):
    return ((int(v) + m - 1) // m) * m


def _largest_divisor_leq(n, cap):
    n = int(n)
    cap = max(1, min(int(cap), n))
    for d in range(cap, 0, -1):
        if n % d == 0:
            return d
    return 1


@functools.lru_cache(maxsize=1)
def _budgets():
    """(target f32 bytes per input block, vmem_limit_bytes), per TPU generation."""
    try:
        vmem = int(pltpu.get_tpu_info().vmem_capacity_bytes)
    except Exception:
        vmem = 64 * 1024 * 1024
    if vmem > 96 * 1024 * 1024:
        # v5e / v6e: 128 MiB VMEM -> 4 MiB blocks, generous scoped limit.
        return 4 * 1024 * 1024, 64 * 1024 * 1024
    # v7x: 64 MiB VMEM but ~3.2 TB/s HBM -> bigger blocks, limit <= 48 MiB.
    # (double-buffered in+out plus f32 temporaries stay ~5-6x the block size.)
    return 6 * 1024 * 1024, 48 * 1024 * 1024


def _pick_row_tile(total, budget_rows, min_steps=8):
    """Tile for a sublane (second-to-last) axis: multiple of 8 (or full extent),
    inside the byte budget, and small enough to leave >= min_steps grid steps
    so both v7x TensorCores and the DMA pipeline stay busy."""
    total = int(total)
    if total <= 8:
        return total
    t = max(8, min(total, int(budget_rows)))
    t = min(t, max(8, _round_up(_cdiv(total, min_steps), 8)))
    return (t // 8) * 8


def _pick_lead_tile(total, budget, min_steps):
    """Tile for a leading (non-layout) axis: any size, budget- and step-capped."""
    total = int(total)
    t = max(1, min(total, int(budget)))
    return min(t, max(1, _cdiv(total, min_steps)))


def _choose_2d_view(shape):
    """Pick a free (contiguous-merge) 2-D view (R, C): lane-dense C (>= 256)
    with as many rows as possible, else a single lane-major row."""
    n = max(1, _prod(shape))
    if len(shape) < 2:
        return 1, n
    best = None
    for k in range(1, len(shape)):
        r, c = _prod(shape[:k]), _prod(shape[k:])
        if r >= 2 and c >= 256 and (best is None or c < best[1]):
            best = (r, c)
    return best if best is not None else (1, n)


# --------------------------------------------------------------------------
# Kernels
# --------------------------------------------------------------------------
def _squash_mid_kernel(x_ref, o_ref):
    """Block (pre_t, C, lane_t); L2 reduction over the channel (sublane) axis."""
    x = x_ref[...].astype(jnp.float32)
    sumsq = jnp.sum(x * x, axis=1, keepdims=True)        # (pre_t, 1, lane_t)
    norm = jnp.sqrt(sumsq)
    scale = sumsq / (norm * (1.0 + sumsq))               # norm^2/(norm*(1+norm^2))
    o_ref[...] = (x * scale).astype(o_ref.dtype)


def _squash_last_kernel(x_ref, o_ref):
    """Block (rows_t, D); L2 reduction over the last (lane) axis."""
    x = x_ref[...].astype(jnp.float32)
    sumsq = jnp.sum(x * x, axis=-1, keepdims=True)       # (rows_t, 1)
    norm = jnp.sqrt(sumsq)
    scale = sumsq / (norm * (1.0 + sumsq))
    o_ref[...] = (x * scale).astype(o_ref.dtype)


def _squash_last_packed_kernel(x_ref, o_ref, *, groups, d):
    """Block (rows_t, groups*d): `groups` independent length-`d` norm groups per
    row, packed along lanes so loads/stores stay lane-dense.  Per-group sums
    and the broadcast back over lanes use 0/1 segment matrices on the MXU."""
    x = x_ref[...].astype(jnp.float32)                    # (rt, groups*d)
    width = groups * d
    seg = (lax.broadcasted_iota(jnp.int32, (width, groups), 0) // d
           == lax.broadcasted_iota(jnp.int32, (width, groups), 1)
           ).astype(jnp.float32)                          # (width, groups)
    seg_t = (lax.broadcasted_iota(jnp.int32, (groups, width), 0)
             == lax.broadcasted_iota(jnp.int32, (groups, width), 1) // d
             ).astype(jnp.float32)                        # (groups, width)
    sumsq_g = jnp.dot(x * x, seg, precision=lax.Precision.HIGHEST,
                      preferred_element_type=jnp.float32)  # (rt, groups)
    sumsq = jnp.dot(sumsq_g, seg_t, precision=lax.Precision.HIGHEST,
                    preferred_element_type=jnp.float32)    # (rt, width)
    norm = jnp.sqrt(sumsq)
    scale = sumsq / (norm * (1.0 + sumsq))                 # per-element keeps
    o_ref[...] = (x * scale).astype(o_ref.dtype)           # NaN local to group


def _sumsq_partial_kernel(x_ref, part_ref, *, rows, cols, tm, tc,
                          mask_rows, mask_cols):
    """dim=None pass 1: per-block partial sum of squares (parallel grid).
    Ragged tail blocks are masked in-kernel (OOB reads are undefined)."""
    x = x_ref[...].astype(jnp.float32)
    if mask_rows:
        rid = lax.broadcasted_iota(jnp.int32, x.shape, 0)
        x = jnp.where(rid < rows - pl.program_id(0) * tm, x, 0.0)
    if mask_cols:
        cid = lax.broadcasted_iota(jnp.int32, x.shape, 1)
        x = jnp.where(cid < cols - pl.program_id(1) * tc, x, 0.0)
    part = jnp.sum(x * x, axis=1, keepdims=True)          # lane reduce (tm, 1)
    ssq = jnp.sum(part, axis=0, keepdims=True)            # sublane reduce (1, 1)
    part_ref[...] = ssq.reshape(1, 1, 1, 1)


def _scale_kernel(scale_ref, x_ref, o_ref):
    """dim=None pass 2: multiply by the scalar scale (held in SMEM)."""
    s = scale_ref[0, 0]
    o_ref[...] = (x_ref[...].astype(jnp.float32) * s).astype(o_ref.dtype)


# --------------------------------------------------------------------------
# Wrappers
# --------------------------------------------------------------------------
def _squash_global(x):
    """dim=None: one global L2 norm, tiled two-pass, no padding / slicing."""
    shape = x.shape
    dtype = x.dtype
    block_bytes, vmem_limit = _budgets()

    R, Cc = _choose_2d_view(shape)
    x2 = x.reshape(R, Cc)

    # Lane tile: full extent when min(R,8) rows of it fit the budget, else a
    # multiple of 128 with a ragged (masked) tail.
    rows_for_budget = min(R, 8)
    if Cc <= 128 or Cc * rows_for_budget * 4 <= block_bytes:
        tc = Cc
    else:
        tc = max(128, ((block_bytes // (rows_for_budget * 4)) // 128) * 128)
    nj = _cdiv(Cc, tc)

    tm = _pick_row_tile(R, max(1, block_bytes // (tc * 4)),
                        min_steps=max(2, _cdiv(8, nj)))
    ni = _cdiv(R, tm)
    if ni * nj == 1 and Cc >= 256:
        # Split lanes so there are >= 2 grid steps (both v7x TCs / pipelining).
        tc = max(128, ((Cc // 2) // 128) * 128)
        nj = _cdiv(Cc, tc)

    grid = (ni, nj)
    tile_spec = pl.BlockSpec((tm, tc), lambda i, j: (i, j))
    cparams = pltpu.CompilerParams(
        dimension_semantics=("parallel", "parallel"),
        vmem_limit_bytes=vmem_limit)

    # Pass 1: parallel per-block partial sums of squares.
    partial_kernel = functools.partial(
        _sumsq_partial_kernel, rows=R, cols=Cc, tm=tm, tc=tc,
        mask_rows=(R % tm != 0), mask_cols=(Cc % tc != 0))
    partials = pl.pallas_call(
        partial_kernel,
        out_shape=jax.ShapeDtypeStruct((ni, nj, 1, 1), jnp.float32),
        grid=grid,
        in_specs=[tile_spec],
        out_specs=pl.BlockSpec((1, 1, 1, 1), lambda i, j: (i, j, 0, 0)),
        compiler_params=cparams,
    )(x2)

    ssq = jnp.sum(partials)
    norm = jnp.sqrt(ssq)
    # norm^2 / (norm * (1 + norm^2)); all-zero input -> NaN (matches PyTorch).
    scale = (ssq / (norm * (1.0 + ssq))).reshape(1, 1).astype(jnp.float32)

    # Pass 2: elementwise scale; ragged-edge writes are masked by Pallas.
    out2 = pl.pallas_call(
        _scale_kernel,
        out_shape=jax.ShapeDtypeStruct((R, Cc), dtype),
        grid=grid,
        in_specs=[pl.BlockSpec(memory_space=pltpu.MemorySpace.SMEM), tile_spec],
        out_specs=tile_spec,
        compiler_params=cparams,
    )(scale, x2)

    return out2.reshape(shape)


def _squash_last(x2, block_bytes, vmem_limit):
    """Reduction over the trailing axis; one norm group per row."""
    rows, d = x2.shape
    dtype = x2.dtype

    # Small reduction length: pack several independent groups per 128-lane row
    # (free contiguous reshape) so loads/stores are lane-dense.
    groups = 1
    if d < 128 and rows >= 2:
        groups = _largest_divisor_leq(rows, min(512 // d, max(1, rows // 16)))
    if groups > 1:
        x2 = x2.reshape(rows // groups, groups * d)
        kernel = functools.partial(_squash_last_packed_kernel, groups=groups, d=d)
    else:
        kernel = _squash_last_kernel

    r, width = x2.shape
    # TODO(synk): a single group with an extremely long trailing axis (> ~1.5M
    # elements) would need a multi-step accumulating lane reduction; here the
    # whole reduction axis stays inside one block.
    tm = _pick_row_tile(r, max(1, block_bytes // (width * 4)), min_steps=8)
    spec = pl.BlockSpec((tm, width), lambda i: (i, 0))
    return pl.pallas_call(
        kernel,
        out_shape=jax.ShapeDtypeStruct((r, width), dtype),
        grid=(_cdiv(r, tm),),
        in_specs=[spec],
        out_specs=spec,
        compiler_params=pltpu.CompilerParams(
            dimension_semantics=("parallel",),
            vmem_limit_bytes=vmem_limit),
    )(x2)


def _squash_mid(x3, block_bytes, vmem_limit):
    """Reduction over an interior axis: (pre, C, post), reduce over C (sublanes)."""
    pre, c, post = x3.shape
    dtype = x3.dtype

    # Lane tile: full-extent `post` when it fits the byte budget, otherwise a
    # multiple of 128 with a ragged tail (each (pre, post) is independent).
    if post <= 128 or post * c * 4 <= block_bytes:
        lane_tile = post
    else:
        lane_tile = max(128, ((block_bytes // (c * 4)) // 128) * 128)
    n_lane = _cdiv(post, lane_tile)

    pre_budget = max(1, block_bytes // (c * lane_tile * 4))
    pre_tile = _pick_lead_tile(pre, pre_budget,
                               min_steps=max(2, _cdiv(8, n_lane)))
    n_pre = _cdiv(pre, pre_tile)

    if n_pre * n_lane == 1 and post >= 256:
        # Split lanes so both v7x TensorCores / the DMA pipeline get work.
        lane_tile = max(128, ((post // 2) // 128) * 128)
        n_lane = _cdiv(post, lane_tile)

    spec = pl.BlockSpec((pre_tile, c, lane_tile), lambda i, j: (i, 0, j))
    return pl.pallas_call(
        _squash_mid_kernel,
        out_shape=jax.ShapeDtypeStruct((pre, c, post), dtype),
        grid=(n_pre, n_lane),
        in_specs=[spec],
        out_specs=spec,
        compiler_params=pltpu.CompilerParams(
            dimension_semantics=("parallel", "parallel"),
            vmem_limit_bytes=vmem_limit),
    )(x3)


def squash_pallas(x, dim=None):
    """JAX/Pallas equivalent of Squash(dim=dim, inplace=False).forward(x)."""
    if dim is None:
        return _squash_global(x)

    shape = x.shape
    dim = dim % x.ndim
    c = int(shape[dim])
    pre = _prod(shape[:dim])
    post = _prod(shape[dim + 1:])
    block_bytes, vmem_limit = _budgets()

    if post == 1:
        out = _squash_last(x.reshape(pre, c), block_bytes, vmem_limit)
    else:
        out = _squash_mid(x.reshape(pre, c, post), block_bytes, vmem_limit)
    return out.reshape(shape)


def squash_ref(x, dim=None):
    """Pure-JAX reference matching the PyTorch module (op order preserved)."""
    xf = x.astype(jnp.float32)
    if dim is None:
        norm = jnp.sqrt(jnp.sum(xf * xf))
    else:
        norm = jnp.sqrt(jnp.sum(xf * xf, axis=dim, keepdims=True))
    norm_sq = norm * norm
    return ((xf / (norm * (1.0 + norm_sq))) * norm_sq).astype(x.dtype)


if __name__ == "__main__":
    key = jax.random.PRNGKey(0)
    # Small NCHW-like input consistent with how Squash is used downstream.
    x = jax.random.normal(key, (2, 4, 16, 16), dtype=jnp.float32)

    # Exercise: default Squash() (dim=None, global norm), per-channel (dim=1),
    # last-axis (dim=3, small-D packed path), and leading-axis (dim=0).
    for d in (None, 1, 3, 0):
        out = jax.block_until_ready(squash_pallas(x, dim=d))
        ref = squash_ref(x, dim=d)
        assert out.shape == x.shape and out.dtype == x.dtype, f"shape/dtype dim={d}"
        assert jnp.allclose(out, ref, atol=1e-5, rtol=1e-5), f"mismatch dim={d}"

    print("KERNEL_OK")
</pallas_src>

<mosaic_0001>
module attributes {stable_mosaic.version = 11 : i64} {
  func.func @_sumsq_partial_kernel(%arg0: i32, %arg1: i32, %arg2: memref<8x128xf32, #tpu.memory_space<vmem>>, %arg3: memref<1x1x1x1xf32, #tpu.memory_space<vmem>>) attributes {dimension_semantics = [#tpu.dimension_semantics<parallel>, #tpu.dimension_semantics<parallel>], iteration_bounds = array<i64: 1, 2>, scalar_prefetch = 0 : i64, scratch_operands = 0 : i64, tpu.core_type = #tpu.core_type<tc>, window_params = [{transform_indices = @transform_0, window_bounds = array<i64: 8, 128>}, {transform_indices = @transform_1, window_bounds = array<i64: 1, 1, 1, 1>}]} {
    %c0 = arith.constant 0 : index
    %c0_0 = arith.constant 0 : index
    %0 = vector.load %arg2[%c0, %c0_0] : memref<8x128xf32, #tpu.memory_space<vmem>>, vector<8x128xf32>
    %1 = arith.mulf %0, %0 : vector<8x128xf32>
    %cst = arith.constant dense<0.000000e+00> : vector<8xf32>
    %2 = vector.multi_reduction <add>, %1, %cst [1] : vector<8x128xf32> to vector<8xf32>
    %3 = vector.shape_cast %2 : vector<8xf32> to vector<8x1xf32>
    %cst_1 = arith.constant dense<0.000000e+00> : vector<1xf32>
    %4 = vector.multi_reduction <add>, %3, %cst_1 [0] : vector<8x1xf32> to vector<1xf32>
    %5 = vector.shape_cast %4 : vector<1xf32> to vector<1x1xf32>
    %6 = vector.shape_cast %5 : vector<1x1xf32> to vector<1x1x1x1xf32>
    %c0_2 = arith.constant 0 : index
    %c0_3 = arith.constant 0 : index
    %c0_4 = arith.constant 0 : index
    %c0_5 = arith.constant 0 : index
    %7 = vector.load %arg3[%c0_2, %c0_3, %c0_4, %c0_5] : memref<1x1x1x1xf32, #tpu.memory_space<vmem>>, vector<1x1x1x1xf32>
    tpu.vector_store %arg3[%c0_2, %c0_3, %c0_4, %c0_5], %6 {strides = array<i32>} : memref<1x1x1x1xf32, #tpu.memory_space<vmem>>, vector<1x1x1x1xf32>,
    return
  }
  func.func @transform_0(%arg0: i32, %arg1: i32) -> (i32, i32) {
    %c0_i32 = arith.constant 0 : i32
    return %arg0, %arg1 : i32, i32
  }
  func.func @transform_1(%arg0: i32, %arg1: i32) -> (i32, i32, i32, i32) {
    %c0_i32 = arith.constant 0 : i32
    %c0_i32_0 = arith.constant 0 : i32
    %c0_i32_1 = arith.constant 0 : i32
    return %arg0, %arg1, %c0_i32, %c0_i32_0 : i32, i32, i32, i32
  }
}

</mosaic_0001>

<llo_original>
// kernel: tpu_custom_call.1
$region0: #{tpu_custom_call.1}
  #allocation0 [shape = 'u32[]', space=smem, size = 0x4, offset = 0x4, fixed_abs, tag = 'smem constant byte address 0x4 - core index']
  #allocation1 [shape = 'u32[72,128]{1,0:T(1,128)}', space=vmem, size = 0x9000, scoped, tag = 'internal scratch']
  %s0 = inlined_call_operand.hbm [shape: f32[8,256], index: 0, kind: input, shape index: {}]
  %s1 = inlined_call_operand.vmem [shape: f32[1,2,1,1], index: 1, kind: output, shape index: {}]
  %s2 = sld [smem:[#allocation0]]
  $region41: #{tpu_custom_call.1} parent=0
    _
  %s4 = ssub.s32 1, %s2
  %s5 = scalar_select 0, %s4, %s2
  $region1: #{tpu_custom_call.1} parent=0
    #allocation2 [shape = 'u8[8192]{0}', space=vmem, size = 0x2000, scoped, tag = 'input window, operand 0']
    #allocation3 [shape = 's32[2]{0}', space=sflag, size = 0x8, scoped, tag = 'scoped memory for tpu_custom_call.1']
    %6 = vsyncpa [#allocation3], 0
    %s7 = scalar_lea.sflag [#allocation3], 1
    %8 = vsyncpa %s7, 0
    loop: start=0, step=1, limit=4
    $region2: #{tpu_custom_call.1} parent=1 // loop_pre_header
      _
    $region3: #{tpu_custom_call.1} parent=1 // loop_header
      %s10 = sphi 0, %s14
      %p11 = scmp.ge.s32.totalorder %s10, 4
      %s17 = sphi 0, %s29
      %s18 = sphi 0, %s25
      %s19 = sphi 0, %s17
      %s20 = sphi 0, %s18
      %s21 = sphi 0, %s19
      %s22 = sphi 0, %s20
      %s34 = sphi 0, %s36
      %s37 = sphi 0, %s34
      %s38 = sphi 0, %s37
      %s54 = sphi 0, %s38
      %s62 = sphi 0, %s64
      %s65 = sphi 0, %s62
      %s66 = sphi 0, %s65
      %s82 = sphi 0, %s66
    $region4: #{tpu_custom_call.1} parent=1 // loop_header_branch
      %13 = sbr.rel (%p11) target = $region8
    $region5: #{tpu_custom_call.1} parent=1 // loop_body
      %s15 = ssub.s32 %s10, 1
      %s16 = ssub.s32 %s10, 2
      %s23 = sadd.s32 1, %s18
      %p24 = scmp.ge.s32.totalorder %s23, 2
      %s25 = scalar_select %p24, 0, %s23
      %s26 = sadd.s32 1, %s17
      %s27 = scalar_select %p24, %s26, %s17
      %p28 = scmp.ge.s32.totalorder %s27, 1
      %s29 = scalar_select %p28, 0, %s27
      %s30 = ssub.s32 %s17, %s29
      %s31 = ssub.s32 %s18, %s25
      %s32 = sor.u32 %s30, %s31
      %p33 = scmp.eq.s32.totalorder %s32, 0
      %s35 = sadd.s32 %s34, 1
      %s36 = scalar_select %p33, %s34, %s35
      %p39 = pneg %p33
      %p40 = scmp.eq.s32.totalorder %s10, 1
      %p41 = por %p39, %p40
      %p42 = scmp.ne.s32.totalorder %s34, %s37
      %p43 = scmp.eq.s32.totalorder %s10, 0
      %p44 = por %p42, %p43
      %p45 = scmp.ne.s32.totalorder %s34, %s37
      %p46 = scmp.eq.s32.totalorder %s15, 1
      %p47 = por %p45, %p46
      %p48 = scmp.ne.s32.totalorder %s37, %s38
      %p49 = scmp.eq.s32.totalorder %s15, 0
      %p50 = por %p48, %p49
      %p51 = scmp.ne.s32.totalorder %s37, %s38
      %p52 = scmp.eq.s32.totalorder %s16, 1
      %p53 = por %p51, %p52
      %p55 = scmp.ne.s32.totalorder %s38, %s54
      %p56 = scmp.eq.s32.totalorder %s16, 0
      %p57 = por %p55, %p56
      %s58 = ssub.s32 %s17, %s29
      %s59 = ssub.s32 %s18, %s25
      %s60 = sor.u32 %s58, %s59
      %p61 = scmp.eq.s32.totalorder %s60, 0
      %s63 = sadd.s32 %s62, 1
      %s64 = scalar_select %p61, %s62, %s63
      %p67 = pneg %p61
      %p68 = scmp.eq.s32.totalorder %s10, 1
      %p69 = por %p67, %p68
      %p70 = scmp.ne.s32.totalorder %s62, %s65
      %p71 = scmp.eq.s32.totalorder %s10, 0
      %p72 = por %p70, %p71
      %p73 = scmp.ne.s32.totalorder %s62, %s65
      %p74 = scmp.eq.s32.totalorder %s15, 1
      %p75 = por %p73, %p74
      %p76 = scmp.ne.s32.totalorder %s65, %s66
      %p77 = scmp.eq.s32.totalorder %s15, 0
      %p78 = por %p76, %p77
      %p79 = scmp.ne.s32.totalorder %s65, %s66
      %p80 = scmp.eq.s32.totalorder %s16, 1
      %p81 = por %p79, %p80
      %p83 = scmp.ne.s32.totalorder %s66, %s82
      %p84 = scmp.eq.s32.totalorder %s16, 0
      %p85 = por %p83, %p84
      %p86 = scmp.le.s32.totalorder 1, %s10
      %p87 = scmp.lt.s32.totalorder %s10, 3
      %p88 = pnand %p86, %p87
      %p89 = pneg %p88
      // Predicated region
      $region9: #{tpu_custom_call.1} parent=5 // pred_check
        _
      $region10: #{tpu_custom_call.1} parent=5 // pred_check_branch
        %91 = sbr.rel (%p88) target = $region12
      $region11: #{tpu_custom_call.1} parent=5 // pred_region
        %s92 = ssub.s32 %s10, 1
      $region12: #{tpu_custom_call.1} parent=5 // pred_fallthru
        _
      %p93 = scmp.lt.s32.totalorder %s10, 2
      // Predicated region
      $region13: #{tpu_custom_call.1} parent=5 // pred_check
        %p94 = pneg %p93
      $region14: #{tpu_custom_call.1} parent=5 // pred_check_branch
        %96 = sbr.rel (%p94) target = $region16
      $region15: #{tpu_custom_call.1} parent=5 // pred_region
        // Predicated region
        $region17: #{tpu_custom_call.1} parent=15 // pred_check
          %p97 = pneg %p44
        $region18: #{tpu_custom_call.1} parent=15 // pred_check_branch
          %99 = sbr.rel (%p97) target = $region20
        $region19: #{tpu_custom_call.1} parent=15 // pred_region
          %s100 = sand.u32 %s34, 1
          %s101 = scalar_lea.sflag [#allocation3], %s100
          %s102 = sand.u32 %s34, 1
          %s103 = smul.addr %s102, 8
          %s104 = scalar_lea.vmem [#allocation2], %s103
          %106 = vsyncadd %s101, 0
          %s107 = smul.addr %s17, 2
          %s108 = sadd.s32 %s18, %s107
          %s109 = smul.addr %s108, 8
          %s110 = scalar_lea.hbm %s0, %s109
          %s112 = sshll.u32 %s110, 4
          %s113 = int_to_ptr.hbm [resolvable:$true] %s112
          %s114 = sshll.u32 %s104, 4
          %s115 = int_to_ptr.vmem [resolvable:$true] %s114
          %117 = dma.hbm_to_vmem [thread:$0]  %s113, 128, %s115, %s101
        $region20: #{tpu_custom_call.1} parent=15 // pred_fallthru
          _
      $region16: #{tpu_custom_call.1} parent=5 // pred_fallthru
        _
      %p118 = scmp.le.s32.totalorder 1, %s10
      %p119 = scmp.lt.s32.totalorder %s10, 3
      %p120 = pnand %p118, %p119
      %p121 = pneg %p120
      // Predicated region
      $region21: #{tpu_custom_call.1} parent=5 // pred_check
        _
      $region22: #{tpu_custom_call.1} parent=5 // pred_check_branch
        %123 = sbr.rel (%p120) target = $region24
      $region23: #{tpu_custom_call.1} parent=5 // pred_region
        %s124 = ssub.s32 %s10, 1
        %s125 = sand.u32 %s37, 1
        %s126 = scalar_lea.sflag [#allocation3], %s125
        %s127 = sand.u32 %s37, 1
        %s128 = smul.addr %s127, 8
        %s129 = scalar_lea.vmem [#allocation2], %s128
        // Predicated region
        $region25: #{tpu_custom_call.1} parent=23 // pred_check
          %p130 = pneg %p50
        $region26: #{tpu_custom_call.1} parent=23 // pred_check_branch
          %132 = sbr.rel (%p130) target = $region28
        $region27: #{tpu_custom_call.1} parent=23 // pred_region
          %134 = dma.done %s126, 128
        $region28: #{tpu_custom_call.1} parent=23 // pred_fallthru
          _
        %s135 = sand.u32 %s37, 1
        %s136 = scalar_lea.sflag [#allocation3], %s135
        %s137 = sand.u32 %s37, 1
        %s138 = smul.addr %s137, 8
        %s139 = scalar_lea.vmem [#allocation2], %s138
        %p140 = pneg %p50
        %p141 = pneg %p47
        %p142 = pneg %p78
        %p143 = pneg %p75
        %p144 = scmp.lt.s32.totalorder %s19, 0
        %s145 = scalar_select %p144, %s19, 0
        %p146 = scmp.lt.s32.totalorder %s20, 1
        %s147 = scalar_select %p146, %s20, 1
        %s148 = smul.addr %s145, 2
        %s149 = sadd.s32 %s147, %s148
        %s150 = scalar_lea.vmem %s1, %s149
        %p151 = scmp.lt.s32.totalorder %s19, 0
        %s152 = scalar_select %p151, %s19, 0
        %p153 = scmp.lt.s32.totalorder %s20, 1
        %s154 = scalar_select %p153, %s20, 1
        %s155 = smul.addr %s152, 2
        %s156 = sadd.s32 %s154, %s155
        %s157 = scalar_lea.vmem %s1, %s156
        %v158 = vld [vmem:[%s129] sm:$0xff]
        %v159 = vmul.f32 %v158, %v158
        %160 = vadd.xlane.f32.xlu0 %v159
        %v161 = vpop.xlane.xlu0 %160
        %v162 = vrot.slane %v161, 4
        %v163 = vadd.f32 %v161, %v162
        %v164 = vrot.slane %v163, 2
        %v165 = vadd.f32 %v163, %v164
        %v166 = vrot.slane %v165, 1
        %v167 = vadd.f32 %v165, %v166
        %vm168 = vcmask 0
        %169 = vst.msk [vmem:[%s157] sm:$0x1] %vm168, %v167
        %p170 = scmp.lt.s32.totalorder %s19, 0
        %s171 = scalar_select %p170, %s19, 0
        %p172 = scmp.lt.s32.totalorder %s20, 1
        %s173 = scalar_select %p172, %s20, 1
        %s174 = smul.addr %s171, 2
        %s175 = sadd.s32 %s173, %s174
        %s176 = scalar_lea.vmem %s1, %s175
        // Predicated region
        $region29: #{tpu_custom_call.1} parent=23 // pred_check
          %p177 = pneg %p75
        $region30: #{tpu_custom_call.1} parent=23 // pred_check_branch
          %179 = sbr.rel (%p177) target = $region32
        $region31: #{tpu_custom_call.1} parent=23 // pred_region
          _
        $region32: #{tpu_custom_call.1} parent=23 // pred_fallthru
          _
      $region24: #{tpu_custom_call.1} parent=5 // pred_fallthru
        _
      %p180 = scmp.le.s32.totalorder 2, %s10
      // Predicated region
      $region33: #{tpu_custom_call.1} parent=5 // pred_check
        %p181 = pneg %p180
      $region34: #{tpu_custom_call.1} parent=5 // pred_check_branch
        %183 = sbr.rel (%p181) target = $region36
      $region35: #{tpu_custom_call.1} parent=5 // pred_region
        %s184 = ssub.s32 %s10, 2
        // Predicated region
        $region37: #{tpu_custom_call.1} parent=35 // pred_check
          %p185 = pneg %p81
        $region38: #{tpu_custom_call.1} parent=35 // pred_check_branch
          %187 = sbr.rel (%p185) target = $region40
        $region39: #{tpu_custom_call.1} parent=35 // pred_region
          %p188 = scmp.lt.s32.totalorder %s21, 0
          %s189 = scalar_select %p188, %s21, 0
          %p190 = scmp.lt.s32.totalorder %s22, 1
          %s191 = scalar_select %p190, %s22, 1
          %s192 = smul.addr %s189, 2
          %s193 = sadd.s32 %s191, %s192
          %s194 = scalar_lea.vmem %s1, %s193
        $region40: #{tpu_custom_call.1} parent=35 // pred_fallthru
          _
      $region36: #{tpu_custom_call.1} parent=5 // pred_fallthru
        _
    $region6: #{tpu_custom_call.1} parent=1 // loop_footer
      %s14 = sadd.s32 1, %s10
    $region7: #{tpu_custom_call.1} parent=1 // loop_footer_branch
      %9 = sbr.rel target = $region3
    $region8: #{tpu_custom_call.1} parent=1 // loop_exit
      _
    %195 = vsyncpa [#allocation3], 1
    %s196 = scalar_lea.sflag [#allocation3], 1
    %197 = vsyncpa %s196, 1

</llo_original>
